<compile_context>
chip_gen: v6e
topology: v6e:2x2x1
jax: 0.10.0
libtpu: 0.0.40
codegen_flags: <defaults>
</compile_context>

<pallas_src>
import functools
import math

import jax
import jax.numpy as jnp
from jax.experimental import pallas as pl
from jax.experimental.pallas import tpu as pltpu


def _round_up(x: int, m: int) -> int:
    return ((x + m - 1) // m) * m


def _cdiv(a: int, b: int) -> int:
    return (a + b - 1) // b


def _choose_block(Q: int, block_positions: int) -> int:
    # Big blocks amortize the ~0.35us/step fixed overhead, but keep >=~4 grid steps for
    # large inputs so the "parallel" grid axis can feed both v7x TensorCores.
    quarter = _round_up(max(Q // 4, 128), 128) + 128
    B = min(int(block_positions), quarter)
    return max(256, _round_up(B, 128))          # >=256 so the 128-lane halo fits


# ----------------------------------------------------------------------------
# Pallas kernel: one bf16 MXU dot -> de-duplicated saturation -> one stacked dot.
# ----------------------------------------------------------------------------
def _causal_regressor_kernel(xin_ref, a_ref, tw_ref, out_ref, *,
                             s_window, cond_size, step, kpad):
    # xin_ref : (R, B) bf16          rows = [cases shift 0..s_window-1, beds, alpha]
    #                                 lanes = hidden positions, last 128 lanes = halo
    # a_ref   : (d_hidden, kpad) bf16 folded conv1 (zero cols on beds/alpha/pad rows)
    # tw_ref  : (n_out, cond_size*d_hidden) bf16
    # out_ref : (n_out, step) bf16
    x = xin_ref[...]                                               # (R, B) bf16
    beds = x[s_window:s_window + 1, :].astype(jnp.float32)         # (1, B)
    alpha = x[s_window + 1:s_window + 2, :].astype(jnp.float32)    # (1, B)

    r, b = x.shape
    if kpad > r:                                                   # pad contraction to 8
        x = jnp.concatenate([x, jnp.zeros((kpad - r, b), x.dtype)], axis=0)

    # conv1 (folded): d_hidden rows only -> relu -> saturation, once per distinct value.
    h = jnp.dot(a_ref[...], x, preferred_element_type=jnp.float32)  # (d_hidden, B) f32
    h = jnp.maximum(h, 0.0)
    # 2b*sigmoid((8*sr/b)*h) - b  ==  b*tanh((4*sr/b)*h)   (EUP tanh, no exp/divide)
    h = beds * jnp.tanh(alpha * h)

    # conv2: out[:, p] = sum_c TW_c @ h[:, p+c]  -> sublane-stack the cond_size shifted
    # views (halo lanes guarantee p+c stays inside the block) and do one MXU dot.
    h_stack = jnp.concatenate([h[:, c:c + step] for c in range(cond_size)], axis=0)
    out = jnp.dot(tw_ref[...].astype(jnp.float32), h_stack,
                  preferred_element_type=jnp.float32)              # (n_out, step) f32
    out_ref[...] = out.astype(out_ref.dtype)


# ----------------------------------------------------------------------------
# Wrapper
# ----------------------------------------------------------------------------
@functools.partial(jax.jit, static_argnames=("block_positions",))
def causal_regressor_forward(new_cases, total_beds, senior_pop_rate,
                             ma_weight, temporal_weight, *, block_positions=32768):
    new_cases = new_cases.astype(jnp.float32)
    total_beds = jnp.reshape(total_beds, (-1,)).astype(jnp.float32)
    senior_pop_rate = jnp.reshape(senior_pop_rate, (-1,)).astype(jnp.float32)

    N, T = new_cases.shape
    d_hidden, _, s_window = ma_weight.shape
    n_out, _, cond_size = temporal_weight.shape
    L1 = T - s_window + 1          # hidden length (after conv1)
    L2 = L1 - cond_size + 1        # output length (after conv2)
    Q = N * L1                     # flattened hidden positions = lane axis
    R = s_window + 2               # streamed rows: s_window case shifts + beds + alpha
    KPAD = max(8, _round_up(R, 8)) # contraction depth for the first MXU dot

    # ---- lane blocking: B lanes per grid step, last 128 lanes of each block = halo ----
    B = _choose_block(Q, block_positions)
    step = B - 128                 # valid output lanes per block
    nblocks = _cdiv(Q, step)
    Qp = nblocks * step

    # ---- build (R, Q) streamed stack from strided slices (no gather), emit bf16 -------
    win = jnp.stack([new_cases[:, w:w + L1] for w in range(s_window)], axis=0)  # (sw,N,L1)
    win = win.reshape(s_window, Q)
    beds_row = jnp.broadcast_to(total_beds[None, :, None], (1, N, L1)).reshape(1, Q)
    # NOTE: same divide as the PyTorch reference -> inf/NaN if a real location has beds==0.
    alpha_row = jnp.broadcast_to((4.0 * senior_pop_rate / total_beds)[None, :, None],
                                 (1, N, L1)).reshape(1, Q)
    xin = jnp.concatenate([win, beds_row, alpha_row], axis=0).astype(jnp.bfloat16)

    # ---- overlapping-block (halo) layout: stored block b holds flat lanes
    #      [b*step, b*step + B); built from two strided slices (no gather). ------------
    xin = jnp.pad(xin, ((0, 0), (0, Qp + step - Q)))
    main = xin[:, :Qp].reshape(R, nblocks, step)
    halo = xin[:, step:step + Qp].reshape(R, nblocks, step)[:, :, :B - step]
    xin_blk = jnp.concatenate([main, halo], axis=2).reshape(R, nblocks * B)

    # ---- weights: tiny, grid-resident, bf16 -------------------------------------------
    ma2d = ma_weight.reshape(d_hidden, s_window).astype(jnp.float32)
    a_ma = jnp.zeros((d_hidden, KPAD), jnp.float32).at[:, :s_window].set(ma2d)
    a_ma = a_ma.astype(jnp.bfloat16)                                   # (d_hidden, KPAD)
    tw2d = jnp.transpose(temporal_weight.astype(jnp.float32), (0, 2, 1))
    tw2d = tw2d.reshape(n_out, cond_size * d_hidden).astype(jnp.bfloat16)

    kern = functools.partial(_causal_regressor_kernel, s_window=s_window,
                             cond_size=cond_size, step=step, kpad=KPAD)

    out_flat = pl.pallas_call(
        kern,
        out_shape=jax.ShapeDtypeStruct((n_out, nblocks * step), jnp.bfloat16),
        grid=(nblocks,),
        in_specs=[
            pl.BlockSpec((R, B), lambda i: (0, i)),                       # streamed
            pl.BlockSpec((d_hidden, KPAD), lambda i: (0, 0)),             # resident
            pl.BlockSpec((n_out, cond_size * d_hidden), lambda i: (0, 0)),  # resident
        ],
        out_specs=pl.BlockSpec((n_out, step), lambda i: (0, i)),
        compiler_params=pltpu.CompilerParams(
            dimension_semantics=("parallel",),
            vmem_limit_bytes=48 * 1024 * 1024,   # clears v5e's 16 MiB default, < v7x 64 MiB
        ),
    )(xin_blk, a_ma, tw2d)

    # ---- drop padding + per-location [L2, L1) tail; transpose in bf16, cast once ------
    preds = out_flat[:, :Q].reshape(n_out, N, L1)[:, :, :L2]
    # Consumers wanting max throughput can take `preds` (n_out, N, L2) directly.
    return jnp.transpose(preds, (1, 2, 0)).astype(jnp.float32)            # (N, L2, n_out)


# ----------------------------------------------------------------------------
# Deterministic parameter init (mirrors CausalRegressor._reset_parameters)
# ----------------------------------------------------------------------------
def init_params(key, cond_size, pred_size, n_output, d_hidden, s_window):
    k1, k2 = jax.random.split(key)

    w = jax.nn.softmax(jax.random.uniform(k1, (pred_size,), jnp.float32), axis=0)
    cols = []
    for _ in range(cond_size):
        cols.append(w)
        w = w[:-1]
        w = jnp.concatenate([1.0 - jnp.sum(w, keepdims=True), w], axis=0)
    weights = jnp.stack(cols, axis=1)                        # (pred_size, cond_size)
    weights = jnp.stack([weights] * d_hidden, axis=1)        # (pred_size, d_hidden, cond_size)
    temporal_weight = jnp.concatenate([weights] * n_output, axis=0)

    fan_in, fan_out = 1 * s_window, d_hidden * s_window
    limit = math.sqrt(6.0 / (fan_in + fan_out))
    ma = jax.random.uniform(k2, (d_hidden, 1, s_window), jnp.float32, -limit, limit)
    ma_weight = jax.nn.softmax(ma, axis=2)
    return temporal_weight, ma_weight


# ----------------------------------------------------------------------------
# Pure-JAX reference (exact PyTorch semantics, sigmoid form) for correctness
# ----------------------------------------------------------------------------
def reference_forward(new_cases, total_beds, senior_pop_rate, ma_weight, temporal_weight):
    N, T = new_cases.shape
    d_hidden, _, s_window = ma_weight.shape
    n_out_total, _, cond_size = temporal_weight.shape
    L1 = T - s_window + 1
    L2 = L1 - cond_size + 1

    idx1 = jnp.arange(L1)[:, None] + jnp.arange(s_window)[None, :]
    X = new_cases[:, idx1]                                   # (N, L1, s_window)
    hidden = jnp.einsum('nls,hs->nhl', X, ma_weight[:, 0, :])
    hidden = jnp.maximum(hidden, 0.0)
    beds = total_beds.reshape(N, 1, 1)
    sr = senior_pop_rate.reshape(N, 1, 1)
    hidden = 2.0 * beds / (1.0 + jnp.exp(-(8.0 * sr / beds) * hidden)) - beds

    idx2 = jnp.arange(L2)[:, None] + jnp.arange(cond_size)[None, :]
    H = hidden[:, :, idx2]                                   # (N, d_hidden, L2, cond_size)
    preds = jnp.einsum('nhlc,ohc->nol', H, temporal_weight)
    return jnp.transpose(preds, (0, 2, 1))                   # (N, L2, n_out_total)


# ----------------------------------------------------------------------------
if __name__ == "__main__":
    cond_size, pred_size, n_output = 4, 5, 2
    s_window, d_hidden = 3, 8
    T = 16

    key = jax.random.PRNGKey(0)
    kp, kc, kb, ks = jax.random.split(key, 4)
    temporal_weight, ma_weight = init_params(kp, cond_size, pred_size,
                                             n_output, d_hidden, s_window)

    # Pre-round inputs/weights to the bf16 grid so the f32 reference sees exactly the
    # numbers the kernel streams; remaining error is only the bf16 alpha row + bf16
    # output store (<~1% rel), covered by the loosened tolerances below.
    bf = lambda a: a.astype(jnp.bfloat16).astype(jnp.float32)
    temporal_weight = bf(temporal_weight)
    ma_weight = bf(ma_weight)

    L2 = T - s_window + 1 - cond_size + 1

    # --- test 1: small, single grid block ------------------------------------
    n_location = 3
    new_cases = bf(jax.random.uniform(kc, (n_location, T), jnp.float32, 0.0, 100.0))
    total_beds = bf(jax.random.uniform(kb, (n_location,), jnp.float32, 50.0, 200.0))
    senior_pop_rate = bf(jax.random.uniform(ks, (n_location,), jnp.float32, 0.1, 0.3))

    out = causal_regressor_forward(new_cases, total_beds, senior_pop_rate,
                                   ma_weight, temporal_weight)
    out = jax.block_until_ready(out)
    ref = reference_forward(new_cases, total_beds, senior_pop_rate,
                            ma_weight, temporal_weight)
    assert out.shape == (n_location, L2, n_output * pred_size)
    assert jnp.allclose(out, ref, rtol=2e-2, atol=2e-1), "mismatch vs reference (test 1)"

    # --- test 2: more locations + tiny block -> multi-block grid; exercises the
    #     cross-block halo, per-location tail discard and lane padding. -------
    n_location2 = 37
    kc2, kb2, ks2 = jax.random.split(jax.random.PRNGKey(1), 3)
    new_cases2 = bf(jax.random.uniform(kc2, (n_location2, T), jnp.float32, 0.0, 100.0))
    total_beds2 = bf(jax.random.uniform(kb2, (n_location2,), jnp.float32, 50.0, 200.0))
    senior_pop_rate2 = bf(jax.random.uniform(ks2, (n_location2,), jnp.float32, 0.1, 0.3))

    out2 = causal_regressor_forward(new_cases2, total_beds2, senior_pop_rate2,
                                    ma_weight, temporal_weight, block_positions=256)
    out2 = jax.block_until_ready(out2)
    ref2 = reference_forward(new_cases2, total_beds2, senior_pop_rate2,
                             ma_weight, temporal_weight)
    assert out2.shape == (n_location2, L2, n_output * pred_size)
    assert jnp.allclose(out2, ref2, rtol=2e-2, atol=2e-1), "mismatch vs reference (test 2)"

    print("KERNEL_OK")
</pallas_src>

<mosaic_0001>
module attributes {stable_mosaic.version = 11 : i64} {
  func.func @_causal_regressor_kernel(%arg0: i32, %arg1: memref<5x256xbf16, #tpu.memory_space<vmem>>, %arg2: memref<8x8xbf16, #tpu.memory_space<vmem>>, %arg3: memref<10x32xbf16, #tpu.memory_space<vmem>>, %arg4: memref<10x128xbf16, #tpu.memory_space<vmem>>) attributes {dimension_semantics = [#tpu.dimension_semantics<parallel>], iteration_bounds = array<i64: 1>, scalar_prefetch = 0 : i64, scratch_operands = 0 : i64, tpu.core_type = #tpu.core_type<tc>, window_params = [{transform_indices = @transform_0, window_bounds = array<i64: 5, 256>}, {pipeline_mode = #tpu.pipeline_mode<synchronous>, transform_indices = @transform_1, window_bounds = array<i64: 8, 8>}, {pipeline_mode = #tpu.pipeline_mode<synchronous>, transform_indices = @transform_2, window_bounds = array<i64: 10, 32>}, {transform_indices = @transform_3, window_bounds = array<i64: 10, 128>}]} {
    %c0 = arith.constant 0 : index
    %c0_0 = arith.constant 0 : index
    %0 = vector.load %arg1[%c0, %c0_0] : memref<5x256xbf16, #tpu.memory_space<vmem>>, vector<5x256xbf16>
    %1 = vector.extract_strided_slice %0 {offsets = [3, 0], sizes = [1, 256], strides = [1, 1]} : vector<5x256xbf16> to vector<1x256xbf16>
    %2 = arith.extf %1 : vector<1x256xbf16> to vector<1x256xf32>
    %3 = vector.extract_strided_slice %0 {offsets = [4, 0], sizes = [1, 256], strides = [1, 1]} : vector<5x256xbf16> to vector<1x256xbf16>
    %4 = arith.extf %3 : vector<1x256xbf16> to vector<1x256xf32>
    %cst = arith.constant 0.000000e+00 : bf16
    %5 = vector.broadcast %cst : bf16 to vector<3x256xbf16>
    %6 = tpu.concatenate %0, %5 in 0 : vector<5x256xbf16>, vector<3x256xbf16> -> vector<8x256xbf16>
    %c0_1 = arith.constant 0 : index
    %c0_2 = arith.constant 0 : index
    %7 = vector.load %arg2[%c0_1, %c0_2] : memref<8x8xbf16, #tpu.memory_space<vmem>>, vector<8x8xbf16>
    %cst_3 = arith.constant dense<0.000000e+00> : vector<8x256xf32>
    %8 = tpu.matmul %7, %6, %cst_3 {dimension_numbers = #tpu.dot_dimension_numbers<[1], [0], [0], [1], [0, 0, 1, 1], [], []>} : vector<8x8xbf16>, vector<8x256xbf16>, vector<8x256xf32> -> vector<8x256xf32>
    %cst_4 = arith.constant 0.000000e+00 : f32
    %9 = vector.broadcast %cst_4 : f32 to vector<8x256xf32>
    %10 = arith.maximumf %8, %9 : vector<8x256xf32>
    %11 = vector.broadcast %4 : vector<1x256xf32> to vector<8x256xf32>
    %12 = arith.mulf %11, %10 : vector<8x256xf32>
    %13 = math.tanh %12 : vector<8x256xf32>
    %14 = vector.broadcast %2 : vector<1x256xf32> to vector<8x256xf32>
    %15 = arith.mulf %14, %13 : vector<8x256xf32>
    %16 = vector.extract_strided_slice %15 {offsets = [0, 0], sizes = [8, 128], strides = [1, 1]} : vector<8x256xf32> to vector<8x128xf32>
    %17 = vector.extract_strided_slice %15 {offsets = [0, 1], sizes = [8, 128], strides = [1, 1]} : vector<8x256xf32> to vector<8x128xf32>
    %18 = vector.extract_strided_slice %15 {offsets = [0, 2], sizes = [8, 128], strides = [1, 1]} : vector<8x256xf32> to vector<8x128xf32>
    %19 = vector.extract_strided_slice %15 {offsets = [0, 3], sizes = [8, 128], strides = [1, 1]} : vector<8x256xf32> to vector<8x128xf32>
    %20 = tpu.concatenate %16, %17, %18, %19 in 0 : vector<8x128xf32>, vector<8x128xf32>, vector<8x128xf32>, vector<8x128xf32> -> vector<32x128xf32>
    %c0_5 = arith.constant 0 : index
    %c0_6 = arith.constant 0 : index
    %21 = vector.load %arg3[%c0_5, %c0_6] : memref<10x32xbf16, #tpu.memory_space<vmem>>, vector<10x32xbf16>
    %22 = arith.extf %21 : vector<10x32xbf16> to vector<10x32xf32>
    %cst_7 = arith.constant dense<0.000000e+00> : vector<10x128xf32>
    %23 = tpu.matmul %22, %20, %cst_7 {dimension_numbers = #tpu.dot_dimension_numbers<[1], [0], [0], [1], [0, 0, 1, 1], [], []>} : vector<10x32xf32>, vector<32x128xf32>, vector<10x128xf32> -> vector<10x128xf32>
    %24 = arith.truncf %23 : vector<10x128xf32> to vector<10x128xbf16>
    %c0_8 = arith.constant 0 : index
    %c0_9 = arith.constant 0 : index
    %25 = vector.load %arg4[%c0_8, %c0_9] : memref<10x128xbf16, #tpu.memory_space<vmem>>, vector<10x128xbf16>
    tpu.vector_store %arg4[%c0_8, %c0_9], %24 {strides = array<i32>} : memref<10x128xbf16, #tpu.memory_space<vmem>>, vector<10x128xbf16>,
    return
  }
  func.func @transform_0(%arg0: i32) -> (i32, i32) {
    %c0_i32 = arith.constant 0 : i32
    %c0_i32_0 = arith.constant 0 : i32
    return %c0_i32, %arg0 : i32, i32
  }
  func.func @transform_1(%arg0: i32) -> (i32, i32) {
    %c0_i32 = arith.constant 0 : i32
    %c0_i32_0 = arith.constant 0 : i32
    %c0_i32_1 = arith.constant 0 : i32
    return %c0_i32, %c0_i32_0 : i32, i32
  }
  func.func @transform_2(%arg0: i32) -> (i32, i32) {
    %c0_i32 = arith.constant 0 : i32
    %c0_i32_0 = arith.constant 0 : i32
    %c0_i32_1 = arith.constant 0 : i32
    return %c0_i32, %c0_i32_0 : i32, i32
  }
  func.func @transform_3(%arg0: i32) -> (i32, i32) {
    %c0_i32 = arith.constant 0 : i32
    %c0_i32_0 = arith.constant 0 : i32
    return %c0_i32, %arg0 : i32, i32
  }
}

</mosaic_0001>

<llo_original>
// kernel: causal_regressor_forward.1
$region0: #{causal_regressor_forward.1}
  #allocation0 [shape = 'u32[]', space=smem, size = 0x4, offset = 0x4, fixed_abs, tag = 'smem constant byte address 0x4 - core index']
  #allocation1 [shape = 'u32[144,128]{1,0:T(1,128)}', space=vmem, size = 0x12000, scoped, tag = 'internal scratch']
  %s0 = inlined_call_operand.vmem [shape: bf16[5,256], index: 0, kind: input, shape index: {}]
  %s1 = inlined_call_operand.vmem [shape: bf16[8,8], index: 1, kind: input, shape index: {}]
  %s2 = inlined_call_operand.vmem [shape: bf16[10,32], index: 2, kind: input, shape index: {}]
  %s3 = inlined_call_operand.vmem [shape: bf16[10,128], index: 3, kind: output, shape index: {}]
  %s4 = sld [smem:[#allocation0]]
  $region22: #{causal_regressor_forward.1} parent=0
    _
  %s6 = ssub.s32 1, %s4
  %s7 = scalar_select 0, %s6, %s4
  // Predicated region
  $region2: #{causal_regressor_forward.1} parent=0 // pred_check
    _
  $region3: #{causal_regressor_forward.1} parent=0 // pred_check_branch
    %9 = sbr.rel (0) target = $region5
  $region4: #{causal_regressor_forward.1} parent=0 // pred_region
    _
  $region5: #{causal_regressor_forward.1} parent=0 // pred_fallthru
    _
  // Predicated region
  $region6: #{causal_regressor_forward.1} parent=0 // pred_check
    _
  $region7: #{causal_regressor_forward.1} parent=0 // pred_check_branch
    %11 = sbr.rel (0) target = $region9
  $region8: #{causal_regressor_forward.1} parent=0 // pred_region
    _
  $region9: #{causal_regressor_forward.1} parent=0 // pred_fallthru
    _
  // Predicated region
  $region10: #{causal_regressor_forward.1} parent=0 // pred_check
    _
  $region11: #{causal_regressor_forward.1} parent=0 // pred_check_branch
    %13 = sbr.rel (0) target = $region13
  $region12: #{causal_regressor_forward.1} parent=0 // pred_region
    _
  $region13: #{causal_regressor_forward.1} parent=0 // pred_fallthru
    _
  %v15 = vld [vmem:[%s0] sm:$0x77]
  %v16 = vunpack.c.l.bf16 %v15
  %v17 = vunpack.c.h.bf16 %v15
  %v19 = vunpack.c.l.b16 %v15
  %v20 = vunpack.c.h.b16 %v15
  %v21 = vpack.c.b16 %v19, %v19
  %v22 = vpack.c.b16 %v20, %v20
  %vm25 = vcmask 1042432
  %vm26 = vsmask.f32 2304
  %vm27 = vmand %vm25, %vm26
  %v28 = vsel %vm27, %v21, 0
  %v29 = vsel %vm27, %v22, 0
  %v30 = vld [vmem:[%s1] sm:$0xf]
  %vm31 = vcmask 64512
  %v33 = vsel %vm31, %v30, 0
  %vm35 = vcmask 1043456
  %v37 = vsel %vm35, %v28, 0
  %v40 = vsel %vm35, %v29, 0
  %42 = vmatprep.subr.bf16.mxu0 0
  %43 = vmatpush1.bf16.msra.mxu0 0
  %44 = vmatprep.subr.bf16.mxu0 0
  %45 = vmatpush1.bf16.msra.mxu0 0
  %46 = vmatprep.subr.bf16.mxu0 0
  %47 = vmatpush1.bf16.msra.mxu0 0
  %48 = vmatprep.subr.bf16.mxu0 0
  %49 = vmatpush1.bf16.msra.mxu0 0
  %50 = vmatprep.subr.bf16.mxu0 0
  %51 = vmatpush1.bf16.msra.mxu0 0
  %52 = vmatprep.subr.bf16.mxu0 0
  %53 = vmatpush1.bf16.msra.mxu0 0
  %54 = vmatprep.subr.bf16.mxu0 0
  %55 = vmatpush1.bf16.msra.mxu0 0
  %56 = vmatprep.subr.bf16.mxu0 %v40
  %57 = vmatpush1.bf16.msra.mxu0 %v37
  %58 = vmatprep.subr.bf16.mxu0 0
  %59 = vmatpush2.bf16.msra.mxu0 0
  %60 = vmatprep.subr.bf16.mxu0 0
  %61 = vmatpush2.bf16.msra.mxu0 0
  %62 = vmatprep.subr.bf16.mxu0 0
  %63 = vmatpush2.bf16.msra.mxu0 0
  %64 = vmatprep.subr.bf16.mxu0 0
  %65 = vmatpush2.bf16.msra.mxu0 0
  %66 = vmatprep.subr.bf16.mxu0 0
  %67 = vmatpush2.bf16.msra.mxu0 0
  %68 = vmatprep.subr.bf16.mxu0 0
  %69 = vmatpush2.bf16.msra.mxu0 0
  %70 = vmatprep.subr.bf16.mxu0 0
  %71 = vmatpush2.bf16.msra.mxu0 0
  %72 = vmatprep.subr.bf16.mxu0 0
  %73 = vmatpush2.bf16.msra.mxu0 0
  %74 = vmatprep.mubr.bf16.mxu0 0
  %75 = vmatmul.mubr.bf16.gmra.mxu0 %v33
  %v76 = vpop.f32.mrf.mxu0
  %v77 = vadd.f32 0.0, %v76
  %v78 = vpop.f32.mrf.mxu0
  %v79 = vadd.f32 0.0, %v78
  %v80 = vpop.f32.mrf.mxu0
  %v81 = vpop.f32.mrf.mxu0
  %82 = vdwg.mxu0
  %v83 = vmax.f32 %v77, 0.0
  %v84 = vmax.f32 %v79, 0.0
  %v85 = vlaneseq
  %v86 = vshrl.u32 %v85, 7
  %v87 = vsub.s32 4, %v86
  %v88 = vrot.slane %v16, %v87
  %v89 = vlaneseq
  %v90 = vshrl.u32 %v89, 7
  %v91 = vsub.s32 4, %v90
  %v92 = vrot.slane %v17, %v91
  %v93 = vmul.f32 %v88, %v83
  %v94 = vmul.f32 %v92, %v84
  %v95 = vtanh.pop %v93
  %v96 = vtanh.pop %v94
  %v97 = vlaneseq
  %v98 = vshrl.u32 %v97, 7
  %v99 = vsub.s32 3, %v98
  %v100 = vrot.slane %v16, %v99
  %v101 = vlaneseq
  %v102 = vshrl.u32 %v101, 7
  %v103 = vsub.s32 3, %v102
  %v104 = vrot.slane %v17, %v103
  %v105 = vmul.f32 %v100, %v95
  %v106 = vmul.f32 %v104, %v96
  %109 = vrot.lane.b32.xlu0 %v105, 127
  %v110 = vpop.permute.xlu0 %109
  %111 = vrot.lane.b32.xlu0 %v106, 127
  %v112 = vpop.permute.xlu0 %111
  %vm113 = vcmask 1039360
  %v114 = vsel %vm113, %v110, %v112
  %116 = vrot.lane.b32.xlu0 %v105, 126
  %v117 = vpop.permute.xlu0 %116
  %118 = vrot.lane.b32.xlu0 %v106, 126
  %v119 = vpop.permute.xlu0 %118
  %vm120 = vcmask 1031168
  %v121 = vsel %vm120, %v117, %v119
  %123 = vrot.lane.b32.xlu0 %v105, 125
  %v124 = vpop.permute.xlu0 %123
  %125 = vrot.lane.b32.xlu0 %v106, 125
  %v126 = vpop.permute.xlu0 %125
  %vm127 = vcmask 1022976
  %v128 = vsel %vm127, %v124, %v126
  %v130 = vld [vmem:[%s2] sm:$0xf]
  %v131 = vld [vmem:[%s2 + $0x4] sm:$0x1]
  %v132 = vunpack.c.l.bf16 %v130
  %v133 = vunpack.c.l.bf16 %v131
  %vm134 = vcmask 261120
  %v136 = vsel %vm134, %v132, 0
  %v139 = vsel %vm134, %v133, 0
  %141 = vmatprep.subr.mxu0 0.0
  %142 = vmatpush1.msra.mxu0 0.0
  %143 = vmatprep.subr.mxu0 0.0
  %144 = vmatpush1.msra.mxu0 0.0
  %145 = vmatprep.subr.mxu0 0.0
  %146 = vmatpush1.msra.mxu0 0.0
  %147 = vmatprep.subr.mxu0 0.0
  %148 = vmatpush1.msra.mxu0 0.0
  %149 = vmatprep.subr.mxu0 0.0
  %150 = vmatpush1.msra.mxu0 0.0
  %151 = vmatprep.subr.mxu0 0.0
  %152 = vmatpush1.msra.mxu0 0.0
  %153 = vmatprep.subr.mxu0 0.0
  %154 = vmatpush1.msra.mxu0 0.0
  %155 = vmatprep.subr.mxu0 0.0
  %156 = vmatpush1.msra.mxu0 0.0
  %157 = vmatprep.subr.mxu0 0.0
  %158 = vmatpush1.msra.mxu0 0.0
  %159 = vmatprep.subr.mxu0 0.0
  %160 = vmatpush1.msra.mxu0 0.0
  %161 = vmatprep.subr.mxu0 0.0
  %162 = vmatpush1.msra.mxu0 0.0
  %163 = vmatprep.subr.mxu0 0.0
  %164 = vmatpush1.msra.mxu0 0.0
  %165 = vmatprep.subr.mxu0 0.0
  %166 = vmatpush1.msra.mxu0 %v128
  %167 = vmatprep.subr.mxu0 0.0
  %168 = vmatpush1.msra.mxu0 %v121
  %169 = vmatprep.subr.mxu0 0.0
  %170 = vmatpush1.msra.mxu0 %v114
  %171 = vmatprep.subr.mxu0 0.0
  %172 = vmatpush1.msra.mxu0 %v105
  %173 = vmatprep.subr.mxu0 0.0
  %174 = vmatpush2.msra.mxu0 0.0
  %175 = vmatprep.subr.mxu0 0.0
  %176 = vmatpush2.msra.mxu0 0.0
  %177 = vmatprep.subr.mxu0 0.0
  %178 = vmatpush2.msra.mxu0 0.0
  %179 = vmatprep.subr.mxu0 0.0
  %180 = vmatpush2.msra.mxu0 0.0
  %181 = vmatprep.subr.mxu0 0.0
  %182 = vmatpush2.msra.mxu0 0.0
  %183 = vmatprep.subr.mxu0 0.0
  %184 = vmatpush2.msra.mxu0 0.0
  %185 = vmatprep.subr.mxu0 0.0
  %186 = vmatpush2.msra.mxu0 0.0
  %187 = vmatprep.subr.mxu0 0.0
  %188 = vmatpush2.msra.mxu0 0.0
  %189 = vmatprep.subr.mxu0 0.0
  %190 = vmatpush2.msra.mxu0 0.0
  %191 = vmatprep.subr.mxu0 0.0
  %192 = vmatpush2.msra.mxu0 0.0
  %193 = vmatprep.subr.mxu0 0.0
  %194 = vmatpush2.msra.mxu0 0.0
  %195 = vmatprep.subr.mxu0 0.0
  %196 = vmatpush2.msra.mxu0 0.0
  %197 = vmatprep.subr.mxu0 0.0
  %198 = vmatpush2.msra.mxu0 0.0
  %199 = vmatprep.subr.mxu0 0.0
  %200 = vmatpush2.msra.mxu0 0.0
  %201 = vmatprep.subr.mxu0 0.0
  %202 = vmatpush2.msra.mxu0 0.0
  %203 = vmatprep.subr.mxu0 0.0
  %204 = vmatpush2.msra.mxu0 0.0
  %205 = vmatprep.mubr.f32.mxu0 0.0
  %206 = vmatmul.mubr.f32.gmra.mxu0 %v136
  %v207 = vpop.f32.mrf.mxu0
  %v208 = vadd.f32 0.0, %v207
  %v209 = vpop.f32.mrf.mxu0
  %210 = vmatprep.mubr.f32.mxu0 0.0
  %211 = vmatmul.mubr.f32.gmra.mxu0 %v139
  %v212 = vpop.f32.mrf.mxu0
  %v213 = vadd.f32 0.0, %v212
  %v214 = vpop.f32.mrf.mxu0
  %215 = vdwg.mxu0
  %v216 = vpack.c.bf16 %v213, %v208
  %v218 = vunpack.c.l.b16 %v216
  %v219 = vunpack.c.h.b16 %v216
  %v220 = vpack.c.b16 %v218, %v218
  %v221 = vpack.c.b16 %v219, %v219
  %224 = vst [vmem:[%s3] sm:$0xf] %v220
  %225 = vst [vmem:[%s3 + $0x4] sm:$0x1] %v221
  // Predicated region
  $region14: #{causal_regressor_forward.1} parent=0 // pred_check
    _
  $region15: #{causal_regressor_forward.1} parent=0 // pred_check_branch
    %227 = sbr.rel (0) target = $region17
  $region16: #{causal_regressor_forward.1} parent=0 // pred_region
    _
  $region17: #{causal_regressor_forward.1} parent=0 // pred_fallthru
    _
  // Predicated region
  $region18: #{causal_regressor_forward.1} parent=0 // pred_check
    _
  $region19: #{causal_regressor_forward.1} parent=0 // pred_check_branch
    %229 = sbr.rel (0) target = $region21
  $region20: #{causal_regressor_forward.1} parent=0 // pred_region
    _
  $region21: #{causal_regressor_forward.1} parent=0 // pred_fallthru
    _

</llo_original>
